<compile_context>
chip_gen: v7x
topology: tpu7x:2x2x1
jax: 0.10.0
libtpu: 0.0.40
codegen_flags: <defaults>
</compile_context>

<pallas_src>
import jax
import jax.numpy as jnp
from jax.experimental import pallas as pl
from jax.experimental.pallas import tpu as pltpu


def _leaky_relu(x, slope=0.2):
    return jnp.where(x > 0, x, slope * x)


def _round_up(a, m):
    return ((a + m - 1) // m) * m


def _tensorcores_per_chip():
    """Best-effort TensorCores-per-chip (v7x=2, v5e/v6e=1). Perf heuristic only."""
    try:
        info = pltpu.get_tpu_info()
        for attr in ("num_tensorcores", "tensorcores_per_chip", "num_cores"):
            n = getattr(info, attr, None)
            if isinstance(n, int) and n > 0:
                return n
    except Exception:
        pass
    try:
        d = jax.devices()[0]
        if d.platform == "tpu":
            n = getattr(d, "num_cores", None)
            if isinstance(n, int) and n > 0:
                return n
    except Exception:
        pass
    return 1


def _select_tile(B, tm, n_cores):
    """Pick the batch tile: as large as possible, 8-aligned, no padding needed."""
    tm_eff = max(8, min(_round_up(tm, 8), _round_up(B, 8)))
    if n_cores >= 2:
        # v7x megacore: want >= 2 grid steps per TensorCore so each core can
        # still prefetch block i+1 while computing block i.  Never applied on
        # single-TC v5e/v6e (it would only add fixed per-step overhead).
        target = 2 * min(n_cores, 2)
        if pl.cdiv(B, tm_eff) < target and B >= 8 * target:
            tm_eff = max(8, _round_up(pl.cdiv(B, target), 8))
    if pl.cdiv(B, tm_eff) == 1:
        # Single block: make it exactly the array extent -> no overrun, and any
        # B (even non-multiple-of-8) is legal because the block equals the dim.
        tm_eff = B
    return tm_eff


def _make_kernel(mm_dtype):
    def kernel(x_ref,
               w1_ref, b1_ref,
               w2_ref, b2_ref,
               w3_ref, b3_ref,
               w4_ref, b4_ref,
               o_ref):
        # Cast to the MXU input dtype *inside* the kernel (input DMA stays f32;
        # no separate wrapper-side astype pass over x).  Bias adds, LeakyReLU
        # and sigmoid stay in f32.
        x = x_ref[...].astype(mm_dtype)                                # (tm, D)

        h = jnp.dot(x, w1_ref[...].astype(mm_dtype),
                    preferred_element_type=jnp.float32)                # (tm, 2D)
        h = _leaky_relu(h + b1_ref[...])

        h = jnp.dot(h.astype(mm_dtype), w2_ref[...].astype(mm_dtype),
                    preferred_element_type=jnp.float32)                # (tm, D)
        h = _leaky_relu(h + b2_ref[...])

        h = jnp.dot(h.astype(mm_dtype), w3_ref[...].astype(mm_dtype),
                    preferred_element_type=jnp.float32)                # (tm, D//2)
        h = _leaky_relu(h + b3_ref[...])

        # Final Linear(D//2 -> O) in transposed orientation:
        #   z[o, r] = sum_k w4_row[o, k] * h[r, k]
        # Same contraction pattern as q @ k.T in attention; puts the per-row
        # result along LANES -> lane-dense output store, and the N=1 matmul no
        # longer produces the awkward (tm, 1) column.
        z = jax.lax.dot_general(
            w4_ref[...].astype(mm_dtype), h.astype(mm_dtype),
            dimension_numbers=(((1,), (1,)), ((), ())),
            preferred_element_type=jnp.float32)                        # (O, tm)
        z = z + b4_ref[...]                                            # (O,1) bcast

        o_ref[0] = jax.nn.sigmoid(z).astype(o_ref.dtype)               # (O, tm)

    return kernel


def value_filter_forward(x, params, *, tm=4096, use_bf16_matmul=True):
    """x: (B, D) float32.  Returns (B, 1) float32 (matches the PyTorch module)."""
    B, D = x.shape
    (w1, b1), (w2, b2), (w3, b3), (w4, b4) = params
    O = w4.shape[-1]

    # Tiny parameter re-layouts for the transposed final projection (a few
    # dozen bytes; NOT a per-activation HBM pass).
    w4_row = w4.T          # (O, D//2)
    b4_col = b4.T          # (O, 1)

    mm_dtype = jnp.bfloat16 if use_bf16_matmul else jnp.float32

    tm_eff = _select_tile(B, tm, _tensorcores_per_chip())
    G = pl.cdiv(B, tm_eff)

    def const_spec(arr):
        # Whole (small) parameter resident in VMEM; constant index_map means it
        # is DMA'd once and revisited on every grid step.  At D=32 the total
        # double-buffered parameter footprint is <40 KiB; for large D consider
        # pipeline_mode=pl.Buffered(1) and/or vmem_limit_bytes (size against
        # v7x: 32 MiB scoped / 64 MiB physical).
        return pl.BlockSpec(arr.shape, lambda i: (0,) * arr.ndim)

    out3 = pl.pallas_call(
        _make_kernel(mm_dtype),
        out_shape=jax.ShapeDtypeStruct((G, O, tm_eff), jnp.float32),
        grid_spec=pltpu.PrefetchScalarGridSpec(
            num_scalar_prefetch=0,
            grid=(G,),
            in_specs=[
                pl.BlockSpec((tm_eff, D), lambda i: (i, 0)),   # x tile (ragged
                                                               # last block OK)
                const_spec(w1), const_spec(b1),
                const_spec(w2), const_spec(b2),
                const_spec(w3), const_spec(b3),
                const_spec(w4_row), const_spec(b4_col),
            ],
            # Lane-dense output: each step writes one contiguous (O, tm) row.
            out_specs=pl.BlockSpec((1, O, tm_eff), lambda i: (i, 0, 0)),
        ),
        compiler_params=pltpu.CompilerParams(
            dimension_semantics=("parallel",)),
    )(x, w1, b1, w2, b2, w3, b3, w4_row, b4_col)

    # (G, O, tm) -> (B, O); rows beyond B (ragged last tile) are discarded.
    out = jnp.moveaxis(out3, 1, 2).reshape(G * tm_eff, O)[:B]
    return out


def init_params(key, input_size, output_size=1):
    """Deterministic init mimicking torch.nn.Linear default U(-1/sqrt(fan_in), +)."""
    dims = [(input_size, input_size * 2),
            (input_size * 2, input_size),
            (input_size, input_size // 2),
            (input_size // 2, output_size)]
    params = []
    for (fan_in, fan_out) in dims:
        key, kw, kb = jax.random.split(key, 3)
        bound = 1.0 / (fan_in ** 0.5)
        w = jax.random.uniform(kw, (fan_in, fan_out), jnp.float32, -bound, bound)
        b = jax.random.uniform(kb, (1, fan_out), jnp.float32, -bound, bound)
        params.append((w, b))
    return params


def reference_forward(x, params, mm_dtype=jnp.float32):
    """Pure-JAX reference with the same matmul-input dtype as the kernel."""
    h = x
    for i, (w, b) in enumerate(params):
        z = jnp.dot(h.astype(mm_dtype), w.astype(mm_dtype),
                    preferred_element_type=jnp.float32) + b
        h = jnp.where(z > 0, z, 0.2 * z) if i < 3 else jax.nn.sigmoid(z)
    return h


if __name__ == "__main__":
    # TODO(synk): `.clone().detach().requires_grad_(True)` is autograd plumbing
    # with no inference-time effect; intentionally a no-op here.
    key = jax.random.PRNGKey(0)
    key, kx1, kx2, kx3 = jax.random.split(key, 4)

    D = 32                                   # input_size=32, output_size=1
    params = init_params(key, D, output_size=1)

    # Case 1: tiny batch, exact f32-matmul path vs f32 reference.
    x1 = jax.random.normal(kx1, (8, D), jnp.float32)
    out1 = jax.block_until_ready(
        value_filter_forward(x1, params, use_bf16_matmul=False))
    ref1 = reference_forward(x1, params, jnp.float32)
    assert out1.shape == (8, 1) and out1.dtype == jnp.float32
    assert jnp.allclose(out1, ref1, atol=1e-4, rtol=1e-4), "f32 path mismatch"

    # Case 2: non-multiple-of-8 batch, single full-array block, default bf16
    # MXU path compared against a bf16-matmul reference.
    x2 = jax.random.normal(kx2, (100, D), jnp.float32)
    out2 = jax.block_until_ready(value_filter_forward(x2, params))
    ref2 = reference_forward(x2, params, jnp.bfloat16)
    assert out2.shape == (100, 1)
    assert jnp.allclose(out2, ref2, atol=2e-3, rtol=2e-3), "bf16 path mismatch (B=100)"

    # Case 3: multi-step grid with a ragged last tile (tm override), bf16 path.
    x3 = jax.random.normal(kx3, (300, D), jnp.float32)
    out3 = jax.block_until_ready(value_filter_forward(x3, params, tm=128))
    ref3 = reference_forward(x3, params, jnp.bfloat16)
    assert out3.shape == (300, 1)
    assert jnp.allclose(out3, ref3, atol=2e-3, rtol=2e-3), "bf16 path mismatch (B=300)"

    print("KERNEL_OK")
</pallas_src>

<mosaic_0001>
module attributes {stable_mosaic.version = 11 : i64} {
  func.func @kernel(%arg0: i32, %arg1: memref<8x32xf32, #tpu.memory_space<vmem>>, %arg2: memref<32x64xf32, #tpu.memory_space<vmem>>, %arg3: memref<1x64xf32, #tpu.memory_space<vmem>>, %arg4: memref<64x32xf32, #tpu.memory_space<vmem>>, %arg5: memref<1x32xf32, #tpu.memory_space<vmem>>, %arg6: memref<32x16xf32, #tpu.memory_space<vmem>>, %arg7: memref<1x16xf32, #tpu.memory_space<vmem>>, %arg8: memref<1x16xf32, #tpu.memory_space<vmem>>, %arg9: memref<1x1xf32, #tpu.memory_space<vmem>>, %arg10: memref<1x1x8xf32, #tpu.memory_space<vmem>>) attributes {dimension_semantics = [#tpu.dimension_semantics<parallel>], iteration_bounds = array<i64: 1>, scalar_prefetch = 0 : i64, scratch_operands = 0 : i64, tpu.core_type = #tpu.core_type<tc>, window_params = [{transform_indices = @transform_0, window_bounds = array<i64: 8, 32>}, {pipeline_mode = #tpu.pipeline_mode<synchronous>, transform_indices = @transform_1, window_bounds = array<i64: 32, 64>}, {pipeline_mode = #tpu.pipeline_mode<synchronous>, transform_indices = @transform_2, window_bounds = array<i64: 1, 64>}, {pipeline_mode = #tpu.pipeline_mode<synchronous>, transform_indices = @transform_3, window_bounds = array<i64: 64, 32>}, {pipeline_mode = #tpu.pipeline_mode<synchronous>, transform_indices = @transform_4, window_bounds = array<i64: 1, 32>}, {pipeline_mode = #tpu.pipeline_mode<synchronous>, transform_indices = @transform_5, window_bounds = array<i64: 32, 16>}, {pipeline_mode = #tpu.pipeline_mode<synchronous>, transform_indices = @transform_6, window_bounds = array<i64: 1, 16>}, {pipeline_mode = #tpu.pipeline_mode<synchronous>, transform_indices = @transform_7, window_bounds = array<i64: 1, 16>}, {pipeline_mode = #tpu.pipeline_mode<synchronous>, transform_indices = @transform_8, window_bounds = array<i64: 1, 1>}, {transform_indices = @transform_9, window_bounds = array<i64: 1, 1, 8>}]} {
    %c0 = arith.constant 0 : index
    %c0_0 = arith.constant 0 : index
    %0 = vector.load %arg1[%c0, %c0_0] : memref<8x32xf32, #tpu.memory_space<vmem>>, vector<8x32xf32>
    %c0_1 = arith.constant 0 : index
    %c0_2 = arith.constant 0 : index
    %1 = vector.load %arg2[%c0_1, %c0_2] : memref<32x64xf32, #tpu.memory_space<vmem>>, vector<32x64xf32>
    %cst = arith.constant dense<0.000000e+00> : vector<8x64xf32>
    %2 = tpu.matmul %0, %1, %cst {dimension_numbers = #tpu.dot_dimension_numbers<[1], [0], [0], [1], [0, 0, 1, 1], [], []>} : vector<8x32xf32>, vector<32x64xf32>, vector<8x64xf32> -> vector<8x64xf32>
    %c0_3 = arith.constant 0 : index
    %c0_4 = arith.constant 0 : index
    %3 = vector.load %arg3[%c0_3, %c0_4] : memref<1x64xf32, #tpu.memory_space<vmem>>, vector<1x64xf32>
    %4 = vector.broadcast %3 : vector<1x64xf32> to vector<8x64xf32>
    %5 = arith.addf %2, %4 : vector<8x64xf32>
    %cst_5 = arith.constant 0.000000e+00 : f32
    %6 = vector.broadcast %cst_5 : f32 to vector<8x64xf32>
    %7 = arith.cmpf ogt, %5, %6 : vector<8x64xf32>
    %cst_6 = arith.constant 2.000000e-01 : f32
    %8 = vector.broadcast %cst_6 : f32 to vector<8x64xf32>
    %9 = arith.mulf %8, %5 : vector<8x64xf32>
    %10 = arith.select %7, %5, %9 : vector<8x64xi1>, vector<8x64xf32>
    %c0_7 = arith.constant 0 : index
    %c0_8 = arith.constant 0 : index
    %11 = vector.load %arg4[%c0_7, %c0_8] : memref<64x32xf32, #tpu.memory_space<vmem>>, vector<64x32xf32>
    %cst_9 = arith.constant dense<0.000000e+00> : vector<8x32xf32>
    %12 = tpu.matmul %10, %11, %cst_9 {dimension_numbers = #tpu.dot_dimension_numbers<[1], [0], [0], [1], [0, 0, 1, 1], [], []>} : vector<8x64xf32>, vector<64x32xf32>, vector<8x32xf32> -> vector<8x32xf32>
    %c0_10 = arith.constant 0 : index
    %c0_11 = arith.constant 0 : index
    %13 = vector.load %arg5[%c0_10, %c0_11] : memref<1x32xf32, #tpu.memory_space<vmem>>, vector<1x32xf32>
    %14 = vector.broadcast %13 : vector<1x32xf32> to vector<8x32xf32>
    %15 = arith.addf %12, %14 : vector<8x32xf32>
    %cst_12 = arith.constant 0.000000e+00 : f32
    %16 = vector.broadcast %cst_12 : f32 to vector<8x32xf32>
    %17 = arith.cmpf ogt, %15, %16 : vector<8x32xf32>
    %cst_13 = arith.constant 2.000000e-01 : f32
    %18 = vector.broadcast %cst_13 : f32 to vector<8x32xf32>
    %19 = arith.mulf %18, %15 : vector<8x32xf32>
    %20 = arith.select %17, %15, %19 : vector<8x32xi1>, vector<8x32xf32>
    %c0_14 = arith.constant 0 : index
    %c0_15 = arith.constant 0 : index
    %21 = vector.load %arg6[%c0_14, %c0_15] : memref<32x16xf32, #tpu.memory_space<vmem>>, vector<32x16xf32>
    %cst_16 = arith.constant dense<0.000000e+00> : vector<8x16xf32>
    %22 = tpu.matmul %20, %21, %cst_16 {dimension_numbers = #tpu.dot_dimension_numbers<[1], [0], [0], [1], [0, 0, 1, 1], [], []>} : vector<8x32xf32>, vector<32x16xf32>, vector<8x16xf32> -> vector<8x16xf32>
    %c0_17 = arith.constant 0 : index
    %c0_18 = arith.constant 0 : index
    %23 = vector.load %arg7[%c0_17, %c0_18] : memref<1x16xf32, #tpu.memory_space<vmem>>, vector<1x16xf32>
    %24 = vector.broadcast %23 : vector<1x16xf32> to vector<8x16xf32>
    %25 = arith.addf %22, %24 : vector<8x16xf32>
    %cst_19 = arith.constant 0.000000e+00 : f32
    %26 = vector.broadcast %cst_19 : f32 to vector<8x16xf32>
    %27 = arith.cmpf ogt, %25, %26 : vector<8x16xf32>
    %cst_20 = arith.constant 2.000000e-01 : f32
    %28 = vector.broadcast %cst_20 : f32 to vector<8x16xf32>
    %29 = arith.mulf %28, %25 : vector<8x16xf32>
    %30 = arith.select %27, %25, %29 : vector<8x16xi1>, vector<8x16xf32>
    %c0_21 = arith.constant 0 : index
    %c0_22 = arith.constant 0 : index
    %31 = vector.load %arg8[%c0_21, %c0_22] : memref<1x16xf32, #tpu.memory_space<vmem>>, vector<1x16xf32>
    %cst_23 = arith.constant dense<0.000000e+00> : vector<1x8xf32>
    %32 = tpu.matmul %31, %30, %cst_23 {dimension_numbers = #tpu.dot_dimension_numbers<[1], [1], [0], [0], [0, 0, 1, 0], [], []>} : vector<1x16xf32>, vector<8x16xf32>, vector<1x8xf32> -> vector<1x8xf32>
    %c0_24 = arith.constant 0 : index
    %c0_25 = arith.constant 0 : index
    %33 = vector.load %arg9[%c0_24, %c0_25] : memref<1x1xf32, #tpu.memory_space<vmem>>, vector<1x1xf32>
    %34 = vector.broadcast %33 : vector<1x1xf32> to vector<1x8xf32>
    %35 = arith.addf %32, %34 : vector<1x8xf32>
    %36 = arith.negf %35 : vector<1x8xf32>
    %37 = math.exp %36 : vector<1x8xf32>
    %cst_26 = arith.constant 1.000000e+00 : f32
    %38 = vector.broadcast %cst_26 : f32 to vector<1x8xf32>
    %39 = arith.addf %38, %37 : vector<1x8xf32>
    %40 = arith.divf %38, %39 : vector<1x8xf32>
    %c0_27 = arith.constant 0 : index
    %c0_28 = arith.constant 0 : index
    %c0_29 = arith.constant 0 : index
    %41 = vector.load %arg10[%c0_27, %c0_28, %c0_29] : memref<1x1x8xf32, #tpu.memory_space<vmem>>, vector<1x1x8xf32>
    %42 = vector.shape_cast %41 : vector<1x1x8xf32> to vector<1x8xf32>
    %43 = vector.shape_cast %40 : vector<1x8xf32> to vector<1x1x8xf32>
    tpu.vector_store %arg10[%c0_27, %c0_28, %c0_29], %43 {strides = array<i32>} : memref<1x1x8xf32, #tpu.memory_space<vmem>>, vector<1x1x8xf32>,
    return
  }
  func.func @transform_0(%arg0: i32) -> (i32, i32) {
    %c0_i32 = arith.constant 0 : i32
    %c0_i32_0 = arith.constant 0 : i32
    return %arg0, %c0_i32 : i32, i32
  }
  func.func @transform_1(%arg0: i32) -> (i32, i32) {
    %c0_i32 = arith.constant 0 : i32
    %c0_i32_0 = arith.constant 0 : i32
    %c0_i32_1 = arith.constant 0 : i32
    return %c0_i32, %c0_i32_0 : i32, i32
  }
  func.func @transform_2(%arg0: i32) -> (i32, i32) {
    %c0_i32 = arith.constant 0 : i32
    %c0_i32_0 = arith.constant 0 : i32
    %c0_i32_1 = arith.constant 0 : i32
    return %c0_i32, %c0_i32_0 : i32, i32
  }
  func.func @transform_3(%arg0: i32) -> (i32, i32) {
    %c0_i32 = arith.constant 0 : i32
    %c0_i32_0 = arith.constant 0 : i32
    %c0_i32_1 = arith.constant 0 : i32
    return %c0_i32, %c0_i32_0 : i32, i32
  }
  func.func @transform_4(%arg0: i32) -> (i32, i32) {
    %c0_i32 = arith.constant 0 : i32
    %c0_i32_0 = arith.constant 0 : i32
    %c0_i32_1 = arith.constant 0 : i32
    return %c0_i32, %c0_i32_0 : i32, i32
  }
  func.func @transform_5(%arg0: i32) -> (i32, i32) {
    %c0_i32 = arith.constant 0 : i32
    %c0_i32_0 = arith.constant 0 : i32
    %c0_i32_1 = arith.constant 0 : i32
    return %c0_i32, %c0_i32_0 : i32, i32
  }
  func.func @transform_6(%arg0: i32) -> (i32, i32) {
    %c0_i32 = arith.constant 0 : i32
    %c0_i32_0 = arith.constant 0 : i32
    %c0_i32_1 = arith.constant 0 : i32
    return %c0_i32, %c0_i32_0 : i32, i32
  }
  func.func @transform_7(%arg0: i32) -> (i32, i32) {
    %c0_i32 = arith.constant 0 : i32
    %c0_i32_0 = arith.constant 0 : i32
    %c0_i32_1 = arith.constant 0 : i32
    return %c0_i32, %c0_i32_0 : i32, i32
  }
  func.func @transform_8(%arg0: i32) -> (i32, i32) {
    %c0_i32 = arith.constant 0 : i32
    %c0_i32_0 = arith.constant 0 : i32
    %c0_i32_1 = arith.constant 0 : i32
    return %c0_i32, %c0_i32_0 : i32, i32
  }
  func.func @transform_9(%arg0: i32) -> (i32, i32, i32) {
    %c0_i32 = arith.constant 0 : i32
    %c0_i32_0 = arith.constant 0 : i32
    %c0_i32_1 = arith.constant 0 : i32
    return %arg0, %c0_i32, %c0_i32_0 : i32, i32, i32
  }
}

</mosaic_0001>

<llo_original>
// kernel: tpu_custom_call.1
$region0: #{tpu_custom_call.1}
  #allocation0 [shape = 'u32[]', space=smem, size = 0x4, offset = 0x4, fixed_abs, tag = 'smem constant byte address 0x4 - core index']
  #allocation1 [shape = 'u32[144,128]{1,0:T(1,128)}', space=vmem, size = 0x12000, scoped, tag = 'internal scratch']
  #allocation2 [shape = 'f32[1,1]{1,0:T(1,128)S(1)}', space=vmem, size = 0x200, scoped, tag = 'scoped memory for tpu_custom_call.1']
  %s0 = inlined_call_operand.vmem [shape: f32[8,32], index: 0, kind: input, shape index: {}]
  %s1 = inlined_call_operand.vmem [shape: f32[32,64], index: 1, kind: input, shape index: {}]
  %s2 = inlined_call_operand.vmem [shape: f32[1,64], index: 2, kind: input, shape index: {}]
  %s3 = inlined_call_operand.vmem [shape: f32[64,32], index: 3, kind: input, shape index: {}]
  %s4 = inlined_call_operand.vmem [shape: f32[1,32], index: 4, kind: input, shape index: {}]
  %s5 = inlined_call_operand.vmem [shape: f32[32,16], index: 5, kind: input, shape index: {}]
  %s6 = inlined_call_operand.vmem [shape: f32[1,16], index: 6, kind: input, shape index: {}]
  %s7 = inlined_call_operand.vmem [shape: f32[1,16], index: 7, kind: input, shape index: {}]
  %s8 = inlined_call_operand.<no memory space> [shape: f32[1,1], index: 8, kind: input, shape index: {}]
  %s9 = inlined_call_operand.hbm [shape: f32[1,1,8], index: 9, kind: output, shape index: {}]
  %s10 = sld [smem:[#allocation0]]
  $region46: #{tpu_custom_call.1} parent=0
    _
  %s12 = ssub.s32 1, %s10
  %s13 = scalar_select 0, %s12, %s10
  %v14 = vstv %s8
  %15 = vst [vmem:[#allocation2] sm:$0x1] %v14
  $region1: #{tpu_custom_call.1} parent=0
    #allocation3 [shape = 'u8[512]{0}', space=vmem, size = 0x400, scoped, tag = 'output window, operand 0, single buffered']
    #allocation4 [shape = 's32[1]{0}', space=sflag, size = 0x4, scoped, tag = 'scoped memory for tpu_custom_call.1']
    %16 = vsyncpa [#allocation4], 0
    // Predicated region
    $region2: #{tpu_custom_call.1} parent=1 // pred_check
      _
    $region3: #{tpu_custom_call.1} parent=1 // pred_check_branch
      %18 = sbr.rel (0) target = $region5
    $region4: #{tpu_custom_call.1} parent=1 // pred_region
      _
    $region5: #{tpu_custom_call.1} parent=1 // pred_fallthru
      _
    // Predicated region
    $region6: #{tpu_custom_call.1} parent=1 // pred_check
      _
    $region7: #{tpu_custom_call.1} parent=1 // pred_check_branch
      %20 = sbr.rel (0) target = $region9
    $region8: #{tpu_custom_call.1} parent=1 // pred_region
      _
    $region9: #{tpu_custom_call.1} parent=1 // pred_fallthru
      _
    // Predicated region
    $region10: #{tpu_custom_call.1} parent=1 // pred_check
      _
    $region11: #{tpu_custom_call.1} parent=1 // pred_check_branch
      %22 = sbr.rel (0) target = $region13
    $region12: #{tpu_custom_call.1} parent=1 // pred_region
      _
    $region13: #{tpu_custom_call.1} parent=1 // pred_fallthru
      _
    // Predicated region
    $region14: #{tpu_custom_call.1} parent=1 // pred_check
      _
    $region15: #{tpu_custom_call.1} parent=1 // pred_check_branch
      %24 = sbr.rel (0) target = $region17
    $region16: #{tpu_custom_call.1} parent=1 // pred_region
      _
    $region17: #{tpu_custom_call.1} parent=1 // pred_fallthru
      _
    // Predicated region
    $region18: #{tpu_custom_call.1} parent=1 // pred_check
      _
    $region19: #{tpu_custom_call.1} parent=1 // pred_check_branch
      %26 = sbr.rel (0) target = $region21
    $region20: #{tpu_custom_call.1} parent=1 // pred_region
      _
    $region21: #{tpu_custom_call.1} parent=1 // pred_fallthru
      _
    // Predicated region
    $region22: #{tpu_custom_call.1} parent=1 // pred_check
      _
    $region23: #{tpu_custom_call.1} parent=1 // pred_check_branch
      %28 = sbr.rel (0) target = $region25
    $region24: #{tpu_custom_call.1} parent=1 // pred_region
      _
    $region25: #{tpu_custom_call.1} parent=1 // pred_fallthru
      _
    // Predicated region
    $region26: #{tpu_custom_call.1} parent=1 // pred_check
      _
    $region27: #{tpu_custom_call.1} parent=1 // pred_check_branch
      %30 = sbr.rel (0) target = $region29
    $region28: #{tpu_custom_call.1} parent=1 // pred_region
      _
    $region29: #{tpu_custom_call.1} parent=1 // pred_fallthru
      _
    // Predicated region
    $region30: #{tpu_custom_call.1} parent=1 // pred_check
      _
    $region31: #{tpu_custom_call.1} parent=1 // pred_check_branch
      %32 = sbr.rel (0) target = $region33
    $region32: #{tpu_custom_call.1} parent=1 // pred_region
      _
    $region33: #{tpu_custom_call.1} parent=1 // pred_fallthru
      _
    // Predicated region
    $region34: #{tpu_custom_call.1} parent=1 // pred_check
      _
    $region35: #{tpu_custom_call.1} parent=1 // pred_check_branch
      %34 = sbr.rel (0) target = $region37
    $region36: #{tpu_custom_call.1} parent=1 // pred_region
      _
    $region37: #{tpu_custom_call.1} parent=1 // pred_fallthru
      _
    %v35 = vld [vmem:[%s0] sm:$0xff]
    %v36 = vld [vmem:[%s1] sm:$0xff]
    %v37 = vld [vmem:[%s1 + $0x8] sm:$0xff]
    %v38 = vld [vmem:[%s1 + $0x10] sm:$0xff]
    %v39 = vld [vmem:[%s1 + $0x18] sm:$0xff]
    %v40 = vld [vmem:[%s2] sm:$0x1]
    %v42 = vlaneseq
    %v43 = vshrl.u32 %v42, 7
    %v44 = vsub.s32 0, %v43
    %v45 = vrot.slane %v40, %v44
    %vm47 = vcmask 261120
    %v49 = vsel %vm47, %v35, 0
    %51 = vmatprep.subr.mxu0 0.0
    %52 = vmatpush1.msra.mxu0 %v36
    %53 = vmatprep.subr.mxu0 0.0
    %54 = vmatpush1.msra.mxu0 %v37
    %55 = vmatprep.subr.mxu0 0.0
    %56 = vmatpush1.msra.mxu0 %v38
    %57 = vmatprep.subr.mxu0 0.0
    %58 = vmatpush1.msra.mxu0 %v39
    %59 = vmatprep.subr.mxu0 0.0
    %60 = vmatpush1.msra.mxu0 0.0
    %61 = vmatprep.subr.mxu0 0.0
    %62 = vmatpush1.msra.mxu0 0.0
    %63 = vmatprep.subr.mxu0 0.0
    %64 = vmatpush1.msra.mxu0 0.0
    %65 = vmatprep.subr.mxu0 0.0
    %66 = vmatpush1.msra.mxu0 0.0
    %67 = vmatprep.subr.mxu0 0.0
    %68 = vmatpush1.msra.mxu0 0.0
    %69 = vmatprep.subr.mxu0 0.0
    %70 = vmatpush1.msra.mxu0 0.0
    %71 = vmatprep.subr.mxu0 0.0
    %72 = vmatpush1.msra.mxu0 0.0
    %73 = vmatprep.subr.mxu0 0.0
    %74 = vmatpush1.msra.mxu0 0.0
    %75 = vmatprep.subr.mxu0 0.0
    %76 = vmatpush1.msra.mxu0 0.0
    %77 = vmatprep.subr.mxu0 0.0
    %78 = vmatpush1.msra.mxu0 0.0
    %79 = vmatprep.subr.mxu0 0.0
    %80 = vmatpush1.msra.mxu0 0.0
    %81 = vmatprep.subr.mxu0 0.0
    %82 = vmatpush1.msra.mxu0 0.0
    %83 = vmatprep.subr.mxu0 0.0
    %84 = vmatpush1.msra.mxu0 0.0
    %85 = vmatprep.subr.mxu0 0.0
    %86 = vmatpush1.msra.mxu0 0.0
    %87 = vmatprep.subr.mxu0 0.0
    %88 = vmatpush1.msra.mxu0 0.0
    %89 = vmatprep.subr.mxu0 0.0
    %90 = vmatpush1.msra.mxu0 0.0
    %91 = vmatprep.subr.mxu0 0.0
    %92 = vmatpush1.msra.mxu0 0.0
    %93 = vmatprep.subr.mxu0 0.0
    %94 = vmatpush1.msra.mxu0 0.0
    %95 = vmatprep.subr.mxu0 0.0
    %96 = vmatpush1.msra.mxu0 0.0
    %97 = vmatprep.subr.mxu0 0.0
    %98 = vmatpush1.msra.mxu0 0.0
    %99 = vmatprep.subr.mxu0 0.0
    %100 = vmatpush1.msra.mxu0 0.0
    %101 = vmatprep.subr.mxu0 0.0
    %102 = vmatpush1.msra.mxu0 0.0
    %103 = vmatprep.subr.mxu0 0.0
    %104 = vmatpush1.msra.mxu0 0.0
    %105 = vmatprep.subr.mxu0 0.0
    %106 = vmatpush1.msra.mxu0 0.0
    %107 = vmatprep.subr.mxu0 0.0
    %108 = vmatpush1.msra.mxu0 0.0
    %109 = vmatprep.subr.mxu0 0.0
    %110 = vmatpush1.msra.mxu0 0.0
    %111 = vmatprep.subr.mxu0 0.0
    %112 = vmatpush1.msra.mxu0 0.0
    %113 = vmatprep.subr.mxu0 0.0
    %114 = vmatpush1.msra.mxu0 0.0
    %115 = vmatprep.mubr.f32.mxu0 0.0
    %116 = vmatmul.mubr.f32.gmra.mrb[0].mxu0 %v49
    %v117 = vpop.f32.mrb[0].mxu0
    %v118 = vadd.f32 %v45, %v117
    %v119 = vpop.f32.mrb[0].mxu0
    %120 = vdwg.mxu0
    %vm121 = vcmp.gt.f32.partialorder %v118, 0.0
    %v122 = vmul.f32 %v118, 0.2
    %v123 = vsel %vm121, %v118, %v122
    %v124 = vld [vmem:[%s3] sm:$0xff]
    %v125 = vld [vmem:[%s3 + $0x8] sm:$0xff]
    %v126 = vld [vmem:[%s3 + $0x10] sm:$0xff]
    %v127 = vld [vmem:[%s3 + $0x18] sm:$0xff]
    %v128 = vld [vmem:[%s3 + $0x20] sm:$0xff]
    %v129 = vld [vmem:[%s3 + $0x28] sm:$0xff]
    %v130 = vld [vmem:[%s3 + $0x30] sm:$0xff]
    %v131 = vld [vmem:[%s3 + $0x38] sm:$0xff]
    %v132 = vld [vmem:[%s4] sm:$0x1]
    %v134 = vlaneseq
    %v135 = vshrl.u32 %v134, 7
    %v136 = vsub.s32 0, %v135
    %v137 = vrot.slane %v132, %v136
    %vm139 = vcmask 523264
    %v141 = vsel %vm139, %v123, 0
    %143 = vmatprep.subr.mxu0 0.0
    %144 = vmatpush1.msra.mxu0 %v124
    %145 = vmatprep.subr.mxu0 0.0
    %146 = vmatpush1.msra.mxu0 %v125
    %147 = vmatprep.subr.mxu0 0.0
    %148 = vmatpush1.msra.mxu0 %v126
    %149 = vmatprep.subr.mxu0 0.0
    %150 = vmatpush1.msra.mxu0 %v127
    %151 = vmatprep.subr.mxu0 0.0
    %152 = vmatpush1.msra.mxu0 %v128
    %153 = vmatprep.subr.mxu0 0.0
    %154 = vmatpush1.msra.mxu0 %v129
    %155 = vmatprep.subr.mxu0 0.0
    %156 = vmatpush1.msra.mxu0 %v130
    %157 = vmatprep.subr.mxu0 0.0
    %158 = vmatpush1.msra.mxu0 %v131
    %159 = vmatprep.subr.mxu0 0.0
    %160 = vmatpush1.msra.mxu0 0.0
    %161 = vmatprep.subr.mxu0 0.0
    %162 = vmatpush1.msra.mxu0 0.0
    %163 = vmatprep.subr.mxu0 0.0
    %164 = vmatpush1.msra.mxu0 0.0
    %165 = vmatprep.subr.mxu0 0.0
    %166 = vmatpush1.msra.mxu0 0.0
    %167 = vmatprep.subr.mxu0 0.0
    %168 = vmatpush1.msra.mxu0 0.0
    %169 = vmatprep.subr.mxu0 0.0
    %170 = vmatpush1.msra.mxu0 0.0
    %171 = vmatprep.subr.mxu0 0.0
    %172 = vmatpush1.msra.mxu0 0.0
    %173 = vmatprep.subr.mxu0 0.0
    %174 = vmatpush1.msra.mxu0 0.0
    %175 = vmatprep.subr.mxu0 0.0
    %176 = vmatpush1.msra.mxu0 0.0
    %177 = vmatprep.subr.mxu0 0.0
    %178 = vmatpush1.msra.mxu0 0.0
    %179 = vmatprep.subr.mxu0 0.0
    %180 = vmatpush1.msra.mxu0 0.0
    %181 = vmatprep.subr.mxu0 0.0
    %182 = vmatpush1.msra.mxu0 0.0
    %183 = vmatprep.subr.mxu0 0.0
    %184 = vmatpush1.msra.mxu0 0.0
    %185 = vmatprep.subr.mxu0 0.0
    %186 = vmatpush1.msra.mxu0 0.0
    %187 = vmatprep.subr.mxu0 0.0
    %188 = vmatpush1.msra.mxu0 0.0
    %189 = vmatprep.subr.mxu0 0.0
    %190 = vmatpush1.msra.mxu0 0.0
    %191 = vmatprep.subr.mxu0 0.0
    %192 = vmatpush1.msra.mxu0 0.0
    %193 = vmatprep.subr.mxu0 0.0
    %194 = vmatpush1.msra.mxu0 0.0
    %195 = vmatprep.subr.mxu0 0.0
    %196 = vmatpush1.msra.mxu0 0.0
    %197 = vmatprep.subr.mxu0 0.0
    %198 = vmatpush1.msra.mxu0 0.0
    %199 = vmatprep.subr.mxu0 0.0
    %200 = vmatpush1.msra.mxu0 0.0
    %201 = vmatprep.subr.mxu0 0.0
    %202 = vmatpush1.msra.mxu0 0.0
    %203 = vmatprep.subr.mxu0 0.0
    %204 = vmatpush1.msra.mxu0 0.0
    %205 = vmatprep.subr.mxu0 0.0
    %206 = vmatpush1.msra.mxu0 0.0
    %207 = vmatprep.mubr.f32.mxu0 0.0
    %208 = vmatmul.mubr.f32.gmra.mrb[0].mxu0 %v141
    %v209 = vpop.f32.mrb[0].mxu0
    %v210 = vadd.f32 %v137, %v209
    %v211 = vpop.f32.mrb[0].mxu0
    %212 = vdwg.mxu0
    %vm213 = vcmp.gt.f32.partialorder %v210, 0.0
    %v214 = vmul.f32 %v210, 0.2
    %v215 = vsel %vm213, %v210, %v214
    %v216 = vld [vmem:[%s5] sm:$0xff]
    %v217 = vld [vmem:[%s5 + $0x8] sm:$0xff]
    %v218 = vld [vmem:[%s5 + $0x10] sm:$0xff]
    %v219 = vld [vmem:[%s5 + $0x18] sm:$0xff]
    %v220 = vld [vmem:[%s6] sm:$0x1]
    %v222 = vlaneseq
    %v223 = vshrl.u32 %v222, 7
    %v224 = vsub.s32 0, %v223
    %v225 = vrot.slane %v220, %v224
    %v228 = vsel %vm47, %v215, 0
    %230 = vmatprep.subr.mxu0 0.0
    %231 = vmatpush1.msra.mxu0 %v216
    %232 = vmatprep.subr.mxu0 0.0
    %233 = vmatpush1.msra.mxu0 %v217
    %234 = vmatprep.subr.mxu0 0.0
    %235 = vmatpush1.msra.mxu0 %v218
    %236 = vmatprep.subr.mxu0 0.0
    %237 = vmatpush1.msra.mxu0 %v219
    %238 = vmatprep.subr.mxu0 0.0
    %239 = vmatpush1.msra.mxu0 0.0
    %240 = vmatprep.subr.mxu0 0.0
    %241 = vmatpush1.msra.mxu0 0.0
    %242 = vmatprep.subr.mxu0 0.0
    %243 = vmatpush1.msra.mxu0 0.0
    %244 = vmatprep.subr.mxu0 0.0
    %245 = vmatpush1.msra.mxu0 0.0
    %246 = vmatprep.subr.mxu0 0.0
    %247 = vmatpush1.msra.mxu0 0.0
    %248 = vmatprep.subr.mxu0 0.0
    %249 = vmatpush1.msra.mxu0 0.0
    %250 = vmatprep.subr.mxu0 0.0
    %251 = vmatpush1.msra.mxu0 0.0
    %252 = vmatprep.subr.mxu0 0.0
    %253 = vmatpush1.msra.mxu0 0.0
    %254 = vmatprep.subr.mxu0 0.0
    %255 = vmatpush1.msra.mxu0 0.0
    %256 = vmatprep.subr.mxu0 0.0
    %257 = vmatpush1.msra.mxu0 0.0
    %258 = vmatprep.subr.mxu0 0.0
    %259 = vmatpush1.msra.mxu0 0.0
    %260 = vmatprep.subr.mxu0 0.0
    %261 = vmatpush1.msra.mxu0 0.0
    %262 = vmatprep.subr.mxu0 0.0
    %263 = vmatpush1.msra.mxu0 0.0
    %264 = vmatprep.subr.mxu0 0.0
    %265 = vmatpush1.msra.mxu0 0.0
    %266 = vmatprep.subr.mxu0 0.0
    %267 = vmatpush1.msra.mxu0 0.0
    %268 = vmatprep.subr.mxu0 0.0
    %269 = vmatpush1.msra.mxu0 0.0
    %270 = vmatprep.subr.mxu0 0.0
    %271 = vmatpush1.msra.mxu0 0.0
    %272 = vmatprep.subr.mxu0 0.0
    %273 = vmatpush1.msra.mxu0 0.0
    %274 = vmatprep.subr.mxu0 0.0
    %275 = vmatpush1.msra.mxu0 0.0
    %276 = vmatprep.subr.mxu0 0.0
    %277 = vmatpush1.msra.mxu0 0.0
    %278 = vmatprep.subr.mxu0 0.0
    %279 = vmatpush1.msra.mxu0 0.0
    %280 = vmatprep.subr.mxu0 0.0
    %281 = vmatpush1.msra.mxu0 0.0
    %282 = vmatprep.subr.mxu0 0.0
    %283 = vmatpush1.msra.mxu0 0.0
    %284 = vmatprep.subr.mxu0 0.0
    %285 = vmatpush1.msra.mxu0 0.0
    %286 = vmatprep.subr.mxu0 0.0
    %287 = vmatpush1.msra.mxu0 0.0
    %288 = vmatprep.subr.mxu0 0.0
    %289 = vmatpush1.msra.mxu0 0.0
    %290 = vmatprep.subr.mxu0 0.0
    %291 = vmatpush1.msra.mxu0 0.0
    %292 = vmatprep.subr.mxu0 0.0
    %293 = vmatpush1.msra.mxu0 0.0
    %294 = vmatprep.mubr.f32.mxu0 0.0
    %295 = vmatmul.mubr.f32.gmra.mrb[0].mxu0 %v228
    %v296 = vpop.f32.mrb[0].mxu0
    %v297 = vadd.f32 %v225, %v296
    %v298 = vpop.f32.mrb[0].mxu0
    %299 = vdwg.mxu0
    %vm300 = vcmp.gt.f32.partialorder %v297, 0.0
    %v301 = vmul.f32 %v297, 0.2
    %v302 = vsel %vm300, %v297, %v301
    %v303 = vld [vmem:[%s7] sm:$0x1]
    %v304 = vld [vmem:[#allocation2] sm:$0x1]
    %306 = vset.pattern.permute.xlu0 0
    %307 = vperm.xlu0 %306, %v304
    %v308 = vpop.permute.xlu0 %307
    %v310 = vlaneseq
    %v311 = vshrl.u32 %v310, 7
    %v312 = vsub.s32 0, %v311
    %v313 = vrot.slane %v308, %v312
    %vm314 = vcmask 130048
    %v316 = vsel %vm314, %v303, 0
    %v319 = vsel %vm314, %v302, 0
    %321 = vmatprep.subr.mxu0 0.0
    %322 = vmatpush1.xpose.msra.mxu0 %v319
    %323 = vmatprep.subr.mxu0 0.0
    %324 = vmatpush1.xpose.msra.mxu0 0.0
    %325 = vmatprep.subr.mxu0 0.0
    %326 = vmatpush1.xpose.msra.mxu0 0.0
    %327 = vmatprep.subr.mxu0 0.0
    %328 = vmatpush1.xpose.msra.mxu0 0.0
    %329 = vmatprep.subr.mxu0 0.0
    %330 = vmatpush1.xpose.msra.mxu0 0.0
    %331 = vmatprep.subr.mxu0 0.0
    %332 = vmatpush1.xpose.msra.mxu0 0.0
    %333 = vmatprep.subr.mxu0 0.0
    %334 = vmatpush1.xpose.msra.mxu0 0.0
    %335 = vmatprep.subr.mxu0 0.0
    %336 = vmatpush1.xpose.msra.mxu0 0.0
    %337 = vmatprep.subr.mxu0 0.0
    %338 = vmatpush1.xpose.msra.mxu0 0.0
    %339 = vmatprep.subr.mxu0 0.0
    %340 = vmatpush1.xpose.msra.mxu0 0.0
    %341 = vmatprep.subr.mxu0 0.0
    %342 = vmatpush1.xpose.msra.mxu0 0.0
    %343 = vmatprep.subr.mxu0 0.0
    %344 = vmatpush1.xpose.msra.mxu0 0.0
    %345 = vmatprep.subr.mxu0 0.0
    %346 = vmatpush1.xpose.msra.mxu0 0.0
    %347 = vmatprep.subr.mxu0 0.0
    %348 = vmatpush1.xpose.msra.mxu0 0.0
    %349 = vmatprep.subr.mxu0 0.0
    %350 = vmatpush1.xpose.msra.mxu0 0.0
    %351 = vmatprep.subr.mxu0 0.0
    %352 = vmatpush1.xpose.msra.mxu0 0.0
    %353 = vmatprep.subr.mxu0 0.0
    %354 = vmatpush1.xpose.msra.mxu0 0.0
    %355 = vmatprep.subr.mxu0 0.0
    %356 = vmatpush1.xpose.msra.mxu0 0.0
    %357 = vmatprep.subr.mxu0 0.0
    %358 = vmatpush1.xpose.msra.mxu0 0.0
    %359 = vmatprep.subr.mxu0 0.0
    %360 = vmatpush1.xpose.msra.mxu0 0.0
    %361 = vmatprep.subr.mxu0 0.0
    %362 = vmatpush1.xpose.msra.mxu0 0.0
    %363 = vmatprep.subr.mxu0 0.0
    %364 = vmatpush1.xpose.msra.mxu0 0.0
    %365 = vmatprep.subr.mxu0 0.0
    %366 = vmatpush1.xpose.msra.mxu0 0.0
    %367 = vmatprep.subr.mxu0 0.0
    %368 = vmatpush1.xpose.msra.mxu0 0.0
    %369 = vmatprep.subr.mxu0 0.0
    %370 = vmatpush1.xpose.msra.mxu0 0.0
    %371 = vmatprep.subr.mxu0 0.0
    %372 = vmatpush1.xpose.msra.mxu0 0.0
    %373 = vmatprep.subr.mxu0 0.0
    %374 = vmatpush1.xpose.msra.mxu0 0.0
    %375 = vmatprep.subr.mxu0 0.0
    %376 = vmatpush1.xpose.msra.mxu0 0.0
    %377 = vmatprep.subr.mxu0 0.0
    %378 = vmatpush1.xpose.msra.mxu0 0.0
    %379 = vmatprep.subr.mxu0 0.0
    %380 = vmatpush1.xpose.msra.mxu0 0.0
    %381 = vmatprep.subr.mxu0 0.0
    %382 = vmatpush1.xpose.msra.mxu0 0.0
    %383 = vmatprep.subr.mxu0 0.0
    %384 = vmatpush1.xpose.msra.mxu0 0.0
    %385 = vmatprep.mubr.f32.mxu0 0.0
    %386 = vmatmul.mubr.f32.gmra.mrb[0].mxu0 %v316
    %v387 = vpop.f32.mrb[0].mxu0
    %v388 = vadd.f32 %v313, %v387
    %v389 = vpop.f32.mrb[0].mxu0
    %390 = vdwg.mxu0
    %v391 = vxor.u32 %v388, 2147483648
    %v392 = vmul.f32 %v391, 1.442695
    %v393 = vpow.pop %v392
    %v394 = vadd.f32 %v393, 1.0
    %v395 = vrcp.pop %v394
    %v396 = vmul.f32 1.0, %v395
    %vm397 = vcmask 57344
    %398 = vst.msk [vmem:[#allocation3] sm:$0x1] %vm397, %v396
    // Predicated region
    $region38: #{tpu_custom_call.1} parent=1 // pred_check
      _
    $region39: #{tpu_custom_call.1} parent=1 // pred_check_branch
      %400 = sbr.rel (0) target = $region41
    $region40: #{tpu_custom_call.1} parent=1 // pred_region
      %s402 = ssub.s32 16, 16
      %403 = vsyncadd [#allocation4], %s402
      %s405 = sshll.u32 [#allocation3], 4
      %s406 = int_to_ptr.vmem [resolvable:$true] %s405
      %408 = dma.vmem_to_hbm [thread:$0]  %s406, 16, %s9, [#allocation4]
    $region41: #{tpu_custom_call.1} parent=1 // pred_fallthru
      _
    // Predicated region
    $region42: #{tpu_custom_call.1} parent=1 // pred_check
      _
    $region43: #{tpu_custom_call.1} parent=1 // pred_check_branch
      %410 = sbr.rel (0) target = $region45
    $region44: #{tpu_custom_call.1} parent=1 // pred_region
      %411 = dma.done [#allocation4], 16
    $region45: #{tpu_custom_call.1} parent=1 // pred_fallthru
      _
    %412 = vsyncpa [#allocation4], 1

</llo_original>
